<compile_context>
chip_gen: v5e
topology: v5e:2x2
jax: 0.10.0
libtpu: 0.0.40
codegen_flags: <defaults>
</compile_context>

<pallas_src>
import functools

import jax
import jax.numpy as jnp
from jax.experimental import pallas as pl
from jax.experimental.pallas import tpu as pltpu


def _round_up(x, m):
    return ((x + m - 1) // m) * m


def _sensor_noise_kernel(iso_ref, img_ref, noise_ref, out_ref, *,
                         bit, black_level, iso_base,
                         read_noise_std, shot_alpha, shot_beta):
    """One lane-dense row-chunk of one batch element: refs are (TH, LANE)."""
    b = pl.program_id(0)                        # batch element

    img = img_ref[...].astype(jnp.float32)      # uint16/f32 N-bit counts -> f32 (VPU cast)
    z = noise_ref[...].astype(jnp.float32)      # bf16 N(0,1) samples -> f32

    # Reference clips the noisy signal at 2**bit - 1 - black_level (see simu_noise).
    max_val = float(2 ** bit - 1 - black_level)
    inv_max_val = 1.0 / max_val

    # gain_digit = iso / iso_base (per batch element, SMEM scalar); gain_analog = 1.0.
    gain = iso_ref[b] * (1.0 / float(iso_base))
    read_var = float(read_noise_std) * float(read_noise_std)

    # Clamp (img - black_level) >= 0 so pixels below the black level cannot produce NaN;
    # identical to the reference for in-range inputs (docstring: [~black_level, 2**bit-1]).
    diff = jnp.maximum(img - float(black_level), 0.0)
    if shot_beta == 0.0:
        # shot_var * gain = (alpha^2 * gain) * diff -> fold gain into scalar constants,
        # single sqrt per element, one fewer vector multiply.
        c1 = (float(shot_alpha) * float(shot_alpha)) * gain
        c2 = read_var * gain * gain
        noise_std = jnp.sqrt(diff * c1 + c2)
    else:
        shot_std = jnp.maximum(float(shot_alpha) * jnp.sqrt(diff) + float(shot_beta), 0.0)
        noise_std = jnp.sqrt(shot_std * shot_std * gain + read_var * gain * gain)

    noisy_nbit = jnp.round(jnp.clip(img + z * noise_std, 0.0, max_val))

    # ISP: black-level compensation / normalization to ~[0, 1]  (single a*x + b).
    # TODO(synk): remaining InvertibleISP stages (demosaic, AWB, CCM, gamma) unavailable.
    out_ref[...] = (noisy_nbit * inv_max_val
                    - float(black_level) * inv_max_val).astype(out_ref.dtype)


def _choose_layout(total_elems, batch, target_block_bytes=2 * 1024 * 1024,
                   granularity=16):
    """Pick a lane-dense (rows, lane) view of the flattened per-image pixels plus a
    row-chunk TH.  lane is always a multiple of 128 (unmasked stores); TH is either the
    full row extent or a multiple of `granularity` (16 -> legal uint16/bf16/f32 tiles)
    and sized so one f32 block is <= target_block_bytes."""
    lane = None
    for lw in (2048, 1024, 512, 256, 128):
        if total_elems % lw == 0:
            lane = lw
            break
    if lane is None:
        lane = 512                        # pad up in the wrapper; never sub-128 lanes
    rows = -(-total_elems // lane)

    max_rows = max(granularity,
                   (target_block_bytes // (lane * 4)) // granularity * granularity)

    if rows <= max_rows:
        th = rows                         # full extent -> always a legal block shape
        # v7x megacore: with batch == 1 a single chunk would idle one TensorCore.
        if batch < 2 and rows >= 2 * granularity:
            th = _round_up(-(-rows // 2), granularity)
    else:
        th = max_rows

    rows_padded = _round_up(rows, th)
    return lane, th, rows_padded


def rgb_sensor_forward(img_nbit, iso, noise_key=None, *,
                       bit=10, black_level=64, iso_base=100,
                       read_noise_std=0.5, shot_alpha=0.4, shot_beta=0.0,
                       out_dtype=jnp.float32,
                       target_block_bytes=2 * 1024 * 1024):
    """RGBSensor.forward.

    Args:
      img_nbit:  (B, C, H, W) in N-bit range [~black_level, 2**bit - 1].  Any integer or
                 float dtype; uint16 recommended (halves load-side HBM traffic).
      iso:       scalar or (B,) ISO value.  Noise model only valid for ISO <= 400.
      noise_key: PRNG key for the N(0,1) shot/read-noise draw (torch.normal equivalent).
      out_dtype: float32 (reference) or bfloat16 (halves writeback traffic).
    Returns:
      (B, C, H, W) image normalized to ~[0, 1] (black-level compensated).
    """
    B, C, H, W = img_nbit.shape
    total = C * H * W
    lane, th, rows_padded = _choose_layout(total, B, target_block_bytes)
    padded_total = rows_padded * lane

    x = img_nbit.reshape(B, total)
    if padded_total != total:
        x = jnp.pad(x, ((0, 0), (0, padded_total - total)))
    x = x.reshape(B, rows_padded, lane)

    iso = jnp.broadcast_to(jnp.asarray(iso, jnp.float32), (B,))

    # Mirror the PyTorch ValueError when iso is concrete; under trace the caller guards.
    try:
        if bool((iso > 400.0).any()):
            raise ValueError("Currently noise model only works for low ISO <= 400")
    except jax.errors.ConcretizationTypeError:
        pass

    if noise_key is None:
        noise_key = jax.random.PRNGKey(0)
    noise = jax.random.normal(noise_key, (B, rows_padded, lane), dtype=jnp.bfloat16)

    kernel = functools.partial(
        _sensor_noise_kernel,
        bit=bit, black_level=black_level, iso_base=iso_base,
        read_noise_std=read_noise_std, shot_alpha=shot_alpha, shot_beta=shot_beta)

    block = (pl.Squeezed(), th, lane)
    idx = lambda b, c, iso_ref: (b, c, 0)

    out = pl.pallas_call(
        kernel,
        out_shape=jax.ShapeDtypeStruct((B, rows_padded, lane), out_dtype),
        grid_spec=pltpu.PrefetchScalarGridSpec(
            num_scalar_prefetch=1,                 # iso lands in SMEM
            grid=(B, rows_padded // th),
            in_specs=[pl.BlockSpec(block, idx),    # image (uint16/f32)
                      pl.BlockSpec(block, idx)],   # N(0,1) noise (bf16)
            out_specs=pl.BlockSpec(block, idx),
        ),
        compiler_params=pltpu.CompilerParams(
            dimension_semantics=("parallel", "parallel"),
            vmem_limit_bytes=32 * 1024 * 1024,     # conservative: v7x has 64 MiB physical
        ),
    )(iso, x, noise)

    out = out.reshape(B, padded_total)[:, :total].reshape(B, C, H, W)
    return out


if __name__ == "__main__":
    bit, black_level = 10, 64
    B, C, H, W = 2, 3, 16, 16

    key = jax.random.PRNGKey(0)
    k_img, k_noise = jax.random.split(key)

    # N-bit input image [~black_level, 2**bit - 1], stored as uint16 (halves HBM reads).
    img_nbit = jnp.round(jax.random.uniform(
        k_img, (B, C, H, W), dtype=jnp.float32,
        minval=float(black_level), maxval=float(2 ** bit - 1))).astype(jnp.uint16)

    # ISO per batch element (noise model only valid for ISO <= 400).
    iso = jnp.array([100.0, 200.0], dtype=jnp.float32)

    out = rgb_sensor_forward(
        img_nbit, iso, noise_key=k_noise,
        bit=bit, black_level=black_level, iso_base=100,
        read_noise_std=0.5, shot_alpha=0.4, shot_beta=0.0)
    out = jax.block_until_ready(out)

    max_val = float(2 ** bit - 1 - black_level)
    assert out.shape == (B, C, H, W) and out.dtype == jnp.float32
    assert bool(jnp.isfinite(out).all())
    # Black-level-compensated output lies in [-black_level/max_val, 1].
    assert bool((out >= -float(black_level) / max_val - 1e-6).all())
    assert bool((out <= 1.0 + 1e-6).all())
    print("KERNEL_OK")
</pallas_src>

<mosaic_0001>
module attributes {stable_mosaic.version = 11 : i64} {
  func.func @_sensor_noise_kernel(%arg0: i32, %arg1: i32, %arg2: memref<2xf32, #tpu.memory_space<smem>>, %arg3: memref<1x3x256xi16, #tpu.memory_space<vmem>>, %arg4: memref<1x3x256xbf16, #tpu.memory_space<vmem>>, %arg5: memref<1x3x256xf32, #tpu.memory_space<vmem>>) attributes {dimension_semantics = [#tpu.dimension_semantics<parallel>, #tpu.dimension_semantics<parallel>], iteration_bounds = array<i64: 2, 1>, scalar_prefetch = 1 : i64, scratch_operands = 0 : i64, tpu.core_type = #tpu.core_type<tc>, window_params = [{transform_indices = @transform_0, window_bounds = array<i64: 1, 3, 256>}, {transform_indices = @transform_1, window_bounds = array<i64: 1, 3, 256>}, {transform_indices = @transform_2, window_bounds = array<i64: 1, 3, 256>}]} {
    %c0 = arith.constant 0 : index
    %c0_0 = arith.constant 0 : index
    %c0_1 = arith.constant 0 : index
    %0 = vector.load %arg3[%c0, %c0_0, %c0_1] : memref<1x3x256xi16, #tpu.memory_space<vmem>>, vector<1x3x256xi16>
    %1 = vector.shape_cast %0 : vector<1x3x256xi16> to vector<3x256xi16>
    %2 = arith.uitofp %1 : vector<3x256xi16> to vector<3x256xf32>
    %c0_2 = arith.constant 0 : index
    %c0_3 = arith.constant 0 : index
    %c0_4 = arith.constant 0 : index
    %3 = vector.load %arg4[%c0_2, %c0_3, %c0_4] : memref<1x3x256xbf16, #tpu.memory_space<vmem>>, vector<1x3x256xbf16>
    %4 = vector.shape_cast %3 : vector<1x3x256xbf16> to vector<3x256xbf16>
    %5 = arith.extf %4 : vector<3x256xbf16> to vector<3x256xf32>
    %6 = arith.index_cast %arg0 : i32 to index
    %7 = memref.load %arg2[%6] : memref<2xf32, #tpu.memory_space<smem>>
    %cst = arith.constant 0.00999999977 : f32
    %8 = arith.mulf %7, %cst : f32
    %cst_5 = arith.constant 6.400000e+01 : f32
    %9 = vector.broadcast %cst_5 : f32 to vector<3x256xf32>
    %10 = arith.subf %2, %9 : vector<3x256xf32>
    %cst_6 = arith.constant 0.000000e+00 : f32
    %11 = vector.broadcast %cst_6 : f32 to vector<3x256xf32>
    %12 = arith.maximumf %10, %11 : vector<3x256xf32>
    %cst_7 = arith.constant 1.600000e-01 : f32
    %13 = arith.mulf %cst_7, %8 : f32
    %cst_8 = arith.constant 2.500000e-01 : f32
    %14 = arith.mulf %cst_8, %8 : f32
    %15 = arith.mulf %14, %8 : f32
    %16 = vector.broadcast %13 : f32 to vector<3x256xf32>
    %17 = arith.mulf %12, %16 : vector<3x256xf32>
    %18 = vector.broadcast %15 : f32 to vector<3x256xf32>
    %19 = arith.addf %17, %18 : vector<3x256xf32>
    %20 = math.sqrt %19 : vector<3x256xf32>
    %21 = arith.mulf %5, %20 : vector<3x256xf32>
    %22 = arith.addf %2, %21 : vector<3x256xf32>
    %cst_9 = arith.constant 0.000000e+00 : f32
    %cst_10 = arith.constant 9.590000e+02 : f32
    %23 = vector.broadcast %cst_9 : f32 to vector<3x256xf32>
    %24 = arith.maximumf %23, %22 : vector<3x256xf32>
    %25 = vector.broadcast %cst_10 : f32 to vector<3x256xf32>
    %26 = arith.minimumf %25, %24 : vector<3x256xf32>
    %27 = math.roundeven %26 : vector<3x256xf32>
    %cst_11 = arith.constant 0.00104275288 : f32
    %28 = vector.broadcast %cst_11 : f32 to vector<3x256xf32>
    %29 = arith.mulf %27, %28 : vector<3x256xf32>
    %cst_12 = arith.constant 0.0667361841 : f32
    %30 = vector.broadcast %cst_12 : f32 to vector<3x256xf32>
    %31 = arith.subf %29, %30 : vector<3x256xf32>
    %c0_13 = arith.constant 0 : index
    %c0_14 = arith.constant 0 : index
    %c0_15 = arith.constant 0 : index
    %32 = vector.load %arg5[%c0_13, %c0_14, %c0_15] : memref<1x3x256xf32, #tpu.memory_space<vmem>>, vector<1x3x256xf32>
    %33 = vector.shape_cast %32 : vector<1x3x256xf32> to vector<3x256xf32>
    %34 = vector.shape_cast %31 : vector<3x256xf32> to vector<1x3x256xf32>
    tpu.vector_store %arg5[%c0_13, %c0_14, %c0_15], %34 {strides = array<i32>} : memref<1x3x256xf32, #tpu.memory_space<vmem>>, vector<1x3x256xf32>,
    return
  }
  func.func @transform_0(%arg0: i32, %arg1: i32, %arg2: memref<2xf32, #tpu.memory_space<smem>>) -> (i32, i32, i32) {
    %c0_i32 = arith.constant 0 : i32
    %c0_i32_0 = arith.constant 0 : i32
    return %arg0, %arg1, %c0_i32 : i32, i32, i32
  }
  func.func @transform_1(%arg0: i32, %arg1: i32, %arg2: memref<2xf32, #tpu.memory_space<smem>>) -> (i32, i32, i32) {
    %c0_i32 = arith.constant 0 : i32
    %c0_i32_0 = arith.constant 0 : i32
    return %arg0, %arg1, %c0_i32 : i32, i32, i32
  }
  func.func @transform_2(%arg0: i32, %arg1: i32, %arg2: memref<2xf32, #tpu.memory_space<smem>>) -> (i32, i32, i32) {
    %c0_i32 = arith.constant 0 : i32
    %c0_i32_0 = arith.constant 0 : i32
    return %arg0, %arg1, %c0_i32 : i32, i32, i32
  }
}

</mosaic_0001>

<llo_original>
// kernel: tpu_custom_call.1
$region0: #{tpu_custom_call.1}
  #allocation0 [shape = 'u32[]', space=smem, size = 0x4, offset = 0x4, fixed_abs, tag = 'smem constant byte address 0x4 - core index']
  #allocation1 [shape = 'u32[72,128]{1,0:T(1,128)}', space=vmem, size = 0x9000, scoped, tag = 'internal scratch']
  #allocation2 [shape = 's32[1]{0}', space=sflag, size = 0x4, scoped, tag = 'scoped memory for tpu_custom_call.1']
  #allocation3 [shape = 'u8[512]{0}', space=smem, size = 0x200, scoped, tag = 'prefetched SMEM operand 0']
  %s0 = inlined_call_operand.vmem [shape: f32[2], index: 0, kind: input, shape index: {}]
  %s1 = inlined_call_operand.vmem [shape: u16[2,3,256], index: 1, kind: input, shape index: {}]
  %s2 = inlined_call_operand.vmem [shape: bf16[2,3,256], index: 2, kind: input, shape index: {}]
  %s3 = inlined_call_operand.vmem [shape: f32[2,3,256], index: 3, kind: output, shape index: {}]
  %s4 = sld [smem:[#allocation0]]
  $region41: #{tpu_custom_call.1} parent=0
    _
  %s6 = ssub.s32 1, %s4
  %s7 = scalar_select 0, %s6, %s4
  %s9 = sshll.u32 %s0, 4
  %s10 = int_to_ptr.vmem [resolvable:$true] %s9
  %12 = dma.vmem_to_smem %s10, 16, [#allocation3], [#allocation2]
  %14 = dma.done [#allocation2], 16
  %15 = sfence
  loop: start=0, step=1, limit=4
  $region2: #{tpu_custom_call.1} parent=0 // loop_pre_header
    _
  $region3: #{tpu_custom_call.1} parent=0 // loop_header
    %s17 = sphi 0, %s21
    %p18 = scmp.ge.s32.totalorder %s17, 4
    %s24 = sphi 0, %s36
    %s25 = sphi 0, %s32
    %s26 = sphi 0, %s24
    %s27 = sphi 0, %s25
    %s28 = sphi 0, %s26
    %s29 = sphi 0, %s27
    %s41 = sphi 0, %s43
    %s44 = sphi 0, %s41
    %s45 = sphi 0, %s44
    %s61 = sphi 0, %s45
    %s69 = sphi 0, %s71
    %s72 = sphi 0, %s69
    %s73 = sphi 0, %s72
    %s89 = sphi 0, %s73
    %s97 = sphi 0, %s99
    %s100 = sphi 0, %s97
    %s101 = sphi 0, %s100
    %s117 = sphi 0, %s101
  $region4: #{tpu_custom_call.1} parent=0 // loop_header_branch
    %20 = sbr.rel (%p18) target = $region8
  $region5: #{tpu_custom_call.1} parent=0 // loop_body
    %s22 = ssub.s32 %s17, 1
    %s23 = ssub.s32 %s17, 2
    %s30 = sadd.s32 1, %s25
    %p31 = scmp.ge.s32.totalorder %s30, 1
    %s32 = scalar_select %p31, 0, %s30
    %s33 = sadd.s32 1, %s24
    %s34 = scalar_select %p31, %s33, %s24
    %p35 = scmp.ge.s32.totalorder %s34, 2
    %s36 = scalar_select %p35, 0, %s34
    %s37 = ssub.s32 %s24, %s36
    %s38 = ssub.s32 %s25, %s32
    %s39 = sor.u32 %s37, %s38
    %p40 = scmp.eq.s32.totalorder %s39, 0
    %s42 = sadd.s32 %s41, 1
    %s43 = scalar_select %p40, %s41, %s42
    %p46 = pneg %p40
    %p47 = scmp.eq.s32.totalorder %s17, 1
    %p48 = por %p46, %p47
    %p49 = scmp.ne.s32.totalorder %s41, %s44
    %p50 = scmp.eq.s32.totalorder %s17, 0
    %p51 = por %p49, %p50
    %p52 = scmp.ne.s32.totalorder %s41, %s44
    %p53 = scmp.eq.s32.totalorder %s22, 1
    %p54 = por %p52, %p53
    %p55 = scmp.ne.s32.totalorder %s44, %s45
    %p56 = scmp.eq.s32.totalorder %s22, 0
    %p57 = por %p55, %p56
    %p58 = scmp.ne.s32.totalorder %s44, %s45
    %p59 = scmp.eq.s32.totalorder %s23, 1
    %p60 = por %p58, %p59
    %p62 = scmp.ne.s32.totalorder %s45, %s61
    %p63 = scmp.eq.s32.totalorder %s23, 0
    %p64 = por %p62, %p63
    %s65 = ssub.s32 %s24, %s36
    %s66 = ssub.s32 %s25, %s32
    %s67 = sor.u32 %s65, %s66
    %p68 = scmp.eq.s32.totalorder %s67, 0
    %s70 = sadd.s32 %s69, 1
    %s71 = scalar_select %p68, %s69, %s70
    %p74 = pneg %p68
    %p75 = scmp.eq.s32.totalorder %s17, 1
    %p76 = por %p74, %p75
    %p77 = scmp.ne.s32.totalorder %s69, %s72
    %p78 = scmp.eq.s32.totalorder %s17, 0
    %p79 = por %p77, %p78
    %p80 = scmp.ne.s32.totalorder %s69, %s72
    %p81 = scmp.eq.s32.totalorder %s22, 1
    %p82 = por %p80, %p81
    %p83 = scmp.ne.s32.totalorder %s72, %s73
    %p84 = scmp.eq.s32.totalorder %s22, 0
    %p85 = por %p83, %p84
    %p86 = scmp.ne.s32.totalorder %s72, %s73
    %p87 = scmp.eq.s32.totalorder %s23, 1
    %p88 = por %p86, %p87
    %p90 = scmp.ne.s32.totalorder %s73, %s89
    %p91 = scmp.eq.s32.totalorder %s23, 0
    %p92 = por %p90, %p91
    %s93 = ssub.s32 %s24, %s36
    %s94 = ssub.s32 %s25, %s32
    %s95 = sor.u32 %s93, %s94
    %p96 = scmp.eq.s32.totalorder %s95, 0
    %s98 = sadd.s32 %s97, 1
    %s99 = scalar_select %p96, %s97, %s98
    %p102 = pneg %p96
    %p103 = scmp.eq.s32.totalorder %s17, 1
    %p104 = por %p102, %p103
    %p105 = scmp.ne.s32.totalorder %s97, %s100
    %p106 = scmp.eq.s32.totalorder %s17, 0
    %p107 = por %p105, %p106
    %p108 = scmp.ne.s32.totalorder %s97, %s100
    %p109 = scmp.eq.s32.totalorder %s22, 1
    %p110 = por %p108, %p109
    %p111 = scmp.ne.s32.totalorder %s100, %s101
    %p112 = scmp.eq.s32.totalorder %s22, 0
    %p113 = por %p111, %p112
    %p114 = scmp.ne.s32.totalorder %s100, %s101
    %p115 = scmp.eq.s32.totalorder %s23, 1
    %p116 = por %p114, %p115
    %p118 = scmp.ne.s32.totalorder %s101, %s117
    %p119 = scmp.eq.s32.totalorder %s23, 0
    %p120 = por %p118, %p119
    %p121 = scmp.le.s32.totalorder 1, %s17
    %p122 = scmp.lt.s32.totalorder %s17, 3
    %p123 = pnand %p121, %p122
    %p124 = pneg %p123
    // Predicated region
    $region9: #{tpu_custom_call.1} parent=5 // pred_check
      _
    $region10: #{tpu_custom_call.1} parent=5 // pred_check_branch
      %126 = sbr.rel (%p123) target = $region12
    $region11: #{tpu_custom_call.1} parent=5 // pred_region
      %s127 = ssub.s32 %s17, 1
    $region12: #{tpu_custom_call.1} parent=5 // pred_fallthru
      _
    %p128 = scmp.lt.s32.totalorder %s17, 2
    // Predicated region
    $region13: #{tpu_custom_call.1} parent=5 // pred_check
      %p129 = pneg %p128
    $region14: #{tpu_custom_call.1} parent=5 // pred_check_branch
      %131 = sbr.rel (%p129) target = $region16
    $region15: #{tpu_custom_call.1} parent=5 // pred_region
      // Predicated region
      $region17: #{tpu_custom_call.1} parent=15 // pred_check
        %p132 = pneg %p51
      $region18: #{tpu_custom_call.1} parent=15 // pred_check_branch
        %134 = sbr.rel (%p132) target = $region20
      $region19: #{tpu_custom_call.1} parent=15 // pred_region
        %p135 = scmp.lt.s32.totalorder %s24, 1
        %s136 = scalar_select %p135, %s24, 1
        %p137 = scmp.lt.s32.totalorder %s25, 0
        %s138 = scalar_select %p137, %s25, 0
        %s139 = smul.addr %s138, 2
        %s140 = smul.addr %s136, 2
        %s141 = sadd.s32 %s139, %s140
        %s142 = smul.addr %s141, 2
        %s143 = scalar_lea.vmem %s1, %s142
      $region20: #{tpu_custom_call.1} parent=15 // pred_fallthru
        _
      // Predicated region
      $region21: #{tpu_custom_call.1} parent=15 // pred_check
        %p144 = pneg %p79
      $region22: #{tpu_custom_call.1} parent=15 // pred_check_branch
        %146 = sbr.rel (%p144) target = $region24
      $region23: #{tpu_custom_call.1} parent=15 // pred_region
        %p147 = scmp.lt.s32.totalorder %s24, 1
        %s148 = scalar_select %p147, %s24, 1
        %p149 = scmp.lt.s32.totalorder %s25, 0
        %s150 = scalar_select %p149, %s25, 0
        %s151 = smul.addr %s150, 2
        %s152 = smul.addr %s148, 2
        %s153 = sadd.s32 %s151, %s152
        %s154 = smul.addr %s153, 2
        %s155 = scalar_lea.vmem %s2, %s154
      $region24: #{tpu_custom_call.1} parent=15 // pred_fallthru
        _
    $region16: #{tpu_custom_call.1} parent=5 // pred_fallthru
      _
    %p156 = scmp.le.s32.totalorder 1, %s17
    %p157 = scmp.lt.s32.totalorder %s17, 3
    %p158 = pnand %p156, %p157
    %p159 = pneg %p158
    // Predicated region
    $region25: #{tpu_custom_call.1} parent=5 // pred_check
      _
    $region26: #{tpu_custom_call.1} parent=5 // pred_check_branch
      %161 = sbr.rel (%p158) target = $region28
    $region27: #{tpu_custom_call.1} parent=5 // pred_region
      %s162 = ssub.s32 %s17, 1
      %p163 = scmp.lt.s32.totalorder %s26, 1
      %s164 = scalar_select %p163, %s26, 1
      %p165 = scmp.lt.s32.totalorder %s27, 0
      %s166 = scalar_select %p165, %s27, 0
      %s167 = smul.addr %s166, 2
      %s168 = smul.addr %s164, 2
      %s169 = sadd.s32 %s167, %s168
      %s170 = smul.addr %s169, 2
      %s171 = scalar_lea.vmem %s1, %s170
      %p172 = pneg %p57
      %p173 = pneg %p54
      %p174 = scmp.lt.s32.totalorder %s26, 1
      %s175 = scalar_select %p174, %s26, 1
      %p176 = scmp.lt.s32.totalorder %s27, 0
      %s177 = scalar_select %p176, %s27, 0
      %s178 = smul.addr %s177, 2
      %s179 = smul.addr %s175, 2
      %s180 = sadd.s32 %s178, %s179
      %s181 = smul.addr %s180, 2
      %s182 = scalar_lea.vmem %s2, %s181
      %p183 = pneg %p85
      %p184 = pneg %p82
      %p185 = pneg %p113
      %p186 = pneg %p110
      %p187 = scmp.lt.s32.totalorder %s26, 1
      %s188 = scalar_select %p187, %s26, 1
      %p189 = scmp.lt.s32.totalorder %s27, 0
      %s190 = scalar_select %p189, %s27, 0
      %s191 = smul.addr %s190, 2
      %s192 = smul.addr %s188, 2
      %s193 = sadd.s32 %s191, %s192
      %s194 = smul.addr %s193, 4
      %s195 = scalar_lea.vmem %s3, %s194
      %p196 = scmp.lt.s32.totalorder %s26, 1
      %s197 = scalar_select %p196, %s26, 1
      %p198 = scmp.lt.s32.totalorder %s27, 0
      %s199 = scalar_select %p198, %s27, 0
      %s200 = smul.addr %s199, 2
      %s201 = smul.addr %s197, 2
      %s202 = sadd.s32 %s200, %s201
      %s203 = smul.addr %s202, 2
      %s204 = scalar_lea.vmem %s1, %s203
      %p205 = scmp.lt.s32.totalorder %s26, 1
      %s206 = scalar_select %p205, %s26, 1
      %p207 = scmp.lt.s32.totalorder %s27, 0
      %s208 = scalar_select %p207, %s27, 0
      %s209 = smul.addr %s208, 2
      %s210 = smul.addr %s206, 2
      %s211 = sadd.s32 %s209, %s210
      %s212 = smul.addr %s211, 2
      %s213 = scalar_lea.vmem %s2, %s212
      %p214 = scmp.lt.s32.totalorder %s26, 1
      %s215 = scalar_select %p214, %s26, 1
      %p216 = scmp.lt.s32.totalorder %s27, 0
      %s217 = scalar_select %p216, %s27, 0
      %s218 = smul.addr %s217, 2
      %s219 = smul.addr %s215, 2
      %s220 = sadd.s32 %s218, %s219
      %s221 = smul.addr %s220, 4
      %s222 = scalar_lea.vmem %s3, %s221
      %v223 = vld [vmem:[%s204] sm:$0xf]
      %v224 = vunpack.c.l.b16 %v223
      %v225 = vand.u32 %v224, 65535
      %v226 = vcvt.s32.f32 %v225
      %v227 = vld [vmem:[%s213] sm:$0xf]
      %v228 = vunpack.c.l.bf16 %v227
      %s229 = sld [smem:[#allocation3 + %s26]]
      %s230 = smul.f32 %s229, 0.01
      %v231 = vsub.f32 %v226, 64.0
      %v232 = vmax.f32 %v231, 0.0
      %s233 = smul.f32 %s230, 0.16
      %s234 = smul.f32 %s230, 0.25
      %s235 = smul.f32 %s234, %s230
      %v236 = vstv %s233
      %v237 = vmul.f32 %v232, %v236
      %v238 = vstv %s235
      %v239 = vadd.f32 %v237, %v238
      %v240 = vrsqrt.pop %v239
      %v241 = vmul.f32 %v240, %v239
      %v242 = vmul.f32 %v241, %v240
      %v243 = vmul.f32 0.5, %v242
      %v244 = vsub.f32 1.5, %v243
      %v245 = vmul.f32 %v240, %v244
      %v246 = vmul.f32 %v239, %v245
      %vm247 = vcmp.eq.f32.partialorder %v239, inf
      %v248 = vsel %vm247, %v239, %v246
      %vm249 = vcmp.eq.f32.partialorder %v239, 0.0
      %v250 = vand.u32 %v239, 2147483648
      %v251 = vsel %vm249, %v250, %v248
      %v252 = vmul.f32 %v228, %v251
      %v253 = vadd.f32 %v226, %v252
      %v254 = vmax.f32 %v253, 0.0
      %v255 = vmin.f32 %v254, 959.0
      %v256 = vround.ne.pseudo %v255
      %v257 = vmul.f32 %v256, 0.0010427529
      %v258 = vsub.f32 %v257, 0.066736184
      %259 = vst [vmem:[%s222] sm:$0x77] %v258
      %p260 = scmp.lt.s32.totalorder %s26, 1
      %s261 = scalar_select %p260, %s26, 1
      %p262 = scmp.lt.s32.totalorder %s27, 0
      %s263 = scalar_select %p262, %s27, 0
      %s264 = smul.addr %s263, 2
      %s265 = smul.addr %s261, 2
      %s266 = sadd.s32 %s264, %s265
      %s267 = smul.addr %s266, 4
      %s268 = scalar_lea.vmem %s3, %s267
      // Predicated region
      $region29: #{tpu_custom_call.1} parent=27 // pred_check
        %p269 = pneg %p110
      $region30: #{tpu_custom_call.1} parent=27 // pred_check_branch
        %271 = sbr.rel (%p269) target = $region32
      $region31: #{tpu_custom_call.1} parent=27 // pred_region
        _
      $region32: #{tpu_custom_call.1} parent=27 // pred_fallthru
        _
    $region28: #{tpu_custom_call.1} parent=5 // pred_fallthru
      _
    %p272 = scmp.le.s32.totalorder 2, %s17
    // Predicated region
    $region33: #{tpu_custom_call.1} parent=5 // pred_check
      %p273 = pneg %p272
    $region34: #{tpu_custom_call.1} parent=5 // pred_check_branch
      %275 = sbr.rel (%p273) target = $region36
    $region35: #{tpu_custom_call.1} parent=5 // pred_region
      %s276 = ssub.s32 %s17, 2
      // Predicated region
      $region37: #{tpu_custom_call.1} parent=35 // pred_check
        %p277 = pneg %p116
      $region38: #{tpu_custom_call.1} parent=35 // pred_check_branch
        %279 = sbr.rel (%p277) target = $region40
      $region39: #{tpu_custom_call.1} parent=35 // pred_region
        %p280 = scmp.lt.s32.totalorder %s28, 1
        %s281 = scalar_select %p280, %s28, 1
        %p282 = scmp.lt.s32.totalorder %s29, 0
        %s283 = scalar_select %p282, %s29, 0
        %s284 = smul.addr %s283, 2
        %s285 = smul.addr %s281, 2
        %s286 = sadd.s32 %s284, %s285
        %s287 = smul.addr %s286, 4
        %s288 = scalar_lea.vmem %s3, %s287
      $region40: #{tpu_custom_call.1} parent=35 // pred_fallthru
        _
    $region36: #{tpu_custom_call.1} parent=5 // pred_fallthru
      _
  $region6: #{tpu_custom_call.1} parent=0 // loop_footer
    %s21 = sadd.s32 1, %s17
  $region7: #{tpu_custom_call.1} parent=0 // loop_footer_branch
    %16 = sbr.rel target = $region3
  $region8: #{tpu_custom_call.1} parent=0 // loop_exit
    _

</llo_original>
